<compile_context>
chip_gen: v5e
topology: v5e:2x2
jax: 0.10.0
libtpu: 0.0.40
codegen_flags: <defaults>
</compile_context>

<pallas_src>
import jax
import jax.numpy as jnp
from jax.experimental import pallas as pl
from jax.experimental.pallas import tpu as pltpu


def _round_up(x, m):
    return ((x + m - 1) // m) * m


# --------------------------------------------------------------------------- #
# Kernel
# --------------------------------------------------------------------------- #
def _make_mlp_kernel(n_layers, compute_dtype):
    """Fused MLP kernel: n_layers Linear layers with ReLU between them."""

    def kernel(*refs):
        x_ref = refs[0]           # (batch_tile, in_dim)        compute_dtype (bf16)
        out_ref = refs[-1]        # (batch_tile, out_pad_last)  f32
        param_refs = refs[1:-1]   # (w0, b0, w1, b1, ...)

        h = x_ref[...]            # bf16 activations straight from HBM
        for i in range(n_layers):
            w = param_refs[2 * i][...]       # (K_i, Npad_i) bf16
            b = param_refs[2 * i + 1][...]   # (1, Npad_i)   f32
            # MXU matmul in bf16, f32 accumulation.
            h = jnp.dot(h, w, preferred_element_type=jnp.float32)
            h = h + b                         # bias-add in f32
            if i < n_layers - 1:
                h = jnp.maximum(h, 0.0)       # ReLU in f32
                h = h.astype(compute_dtype)   # bf16 LHS for the next matmul
        out_ref[...] = h.astype(out_ref.dtype)

    return kernel


# --------------------------------------------------------------------------- #
# One-time parameter preparation (hoisted out of the hot path)
# --------------------------------------------------------------------------- #
def prepare_params(weights, biases, *, compute_dtype=jnp.bfloat16):
    """Pad + cast parameters once; the result is reused by every forward call.

    weights[i]: (in_dim_i, out_dim_i) float32, with in_dim_{i+1} == out_dim_i
    biases[i] : (out_dim_i,) or (1, out_dim_i) float32

    * Each layer's OUTPUT dim is zero-padded to a multiple of 128 (lane-dense).
    * The first layer's contraction dim (latent_dim) is left unpadded.
    * Weights are cast to bf16; biases stay f32.
    Zero padding is exact: padded output columns stay exactly 0 through
    bias-add (padded bias = 0) and ReLU, and contribute exactly 0 to the next
    layer's contraction.
    """
    n_layers = len(weights)
    in_dim = int(weights[0].shape[0])
    action_dim = int(weights[-1].shape[1])

    out_dims = [int(w.shape[1]) for w in weights]
    out_pads = [_round_up(d, 128) for d in out_dims]
    in_pads = [in_dim] + out_pads[:-1]   # layer-i contraction dim

    w_p, b_p = [], []
    for i, (w, b) in enumerate(zip(weights, biases)):
        w = jnp.asarray(w, jnp.float32)
        b = jnp.asarray(b, jnp.float32).reshape(1, -1)
        wp = jnp.pad(w, ((0, in_pads[i] - w.shape[0]),
                         (0, out_pads[i] - w.shape[1])))
        bp = jnp.pad(b, ((0, 0), (0, out_pads[i] - b.shape[1])))
        w_p.append(wp.astype(compute_dtype))   # bf16: half the resident bytes
        b_p.append(bp)                         # f32 bias

    return {
        "weights": w_p,
        "biases": b_p,
        "in_dim": in_dim,
        "action_dim": action_dim,
        "out_pads": out_pads,
        "compute_dtype": compute_dtype,
        "n_layers": n_layers,
    }


# --------------------------------------------------------------------------- #
# Hot path: one pallas_call
# --------------------------------------------------------------------------- #
def discrete_action_net_forward(latent, prepared, *, batch_tile=None,
                                return_padded=False):
    """Fused MLP forward.

    latent: (B, latent_dim).
    Returns (B, action_dim) in latent.dtype, or — with return_padded=True —
    the raw padded (B_pad, out_pad) kernel output so a downstream consumer
    (e.g. argmax over [:, :action_dim]) can skip the slice pass.
    """
    w_p = prepared["weights"]
    b_p = prepared["biases"]
    in_dim = prepared["in_dim"]
    action_dim = prepared["action_dim"]
    out_pads = prepared["out_pads"]
    compute_dtype = prepared["compute_dtype"]
    n_layers = prepared["n_layers"]

    B = latent.shape[0]
    assert latent.shape[1] == in_dim, "latent feature dim mismatch"

    # ---- batch tiling -------------------------------------------------------
    #  * B <= 512: a single grid step (params DMA'd once, no per-step overhead);
    #    tile rounded to 16 rows (bf16 packs 16 rows per sublane group).
    #  * B  > 512: >= 2 grid steps so the "parallel" batch axis can shard across
    #    v7x's 2 TensorCores; tiles capped at 1024 rows (good HBM-roofline
    #    fraction on v5e/v6e, trivially fits VMEM on every generation).
    if batch_tile is None:
        if B <= 512:
            batch_tile = _round_up(B, 16)
        else:
            batch_tile = min(1024, _round_up((B + 1) // 2, 16))
    B_pad = _round_up(B, batch_tile)
    grid = (B_pad // batch_tile,)

    # ---- latent: (optional) batch pad + bf16 cast, fused under jit ----------
    x = latent
    if B_pad != B:
        x = jnp.pad(x, ((0, B_pad - B), (0, 0)))
    x = x.astype(compute_dtype)   # bf16 LHS halves the dominant input DMA

    # ---- BlockSpecs ----------------------------------------------------------
    # Latent: batch-tiled, raw (unpadded) feature width — full last dim is legal.
    in_specs = [pl.BlockSpec((batch_tile, in_dim), lambda i: (i, 0))]
    params = []
    for wp, bp in zip(w_p, b_p):
        # Constant index_map => Pallas fetches these exactly once and keeps them
        # resident in VMEM across all grid steps.
        in_specs.append(pl.BlockSpec(wp.shape, lambda i: (0, 0)))
        in_specs.append(pl.BlockSpec(bp.shape, lambda i: (0, 0)))
        params.extend([wp, bp])
    out_spec = pl.BlockSpec((batch_tile, out_pads[-1]), lambda i: (i, 0))

    # ---- VMEM budget (generation-aware) --------------------------------------
    cd_bytes = jnp.dtype(compute_dtype).itemsize
    param_bytes = sum(int(w.size) * w.dtype.itemsize for w in w_p) \
                + sum(int(b.size) * 4 for b in b_p)
    in_bytes = 2 * batch_tile * in_dim * cd_bytes            # double-buffered input tile
    out_bytes = 2 * batch_tile * out_pads[-1] * 4            # double-buffered output tile
    work_bytes = 4 * batch_tile * max(out_pads) * 4          # in-kernel working values
    vmem_needed = 2 * param_bytes + in_bytes + out_bytes + work_bytes

    vmem_limit = None
    if vmem_needed > 14 * 1024 * 1024:   # above v5e's 16 MiB default scoped VMEM
        phys = 64 * 1024 * 1024          # conservative fallback (v7x physical)
        try:
            phys = int(pltpu.get_tpu_info().vmem_capacity_bytes)
        except Exception:
            pass
        vmem_limit = int(min(vmem_needed + (8 << 20), phys - (8 << 20)))

    kernel = _make_mlp_kernel(n_layers, compute_dtype)

    out_padded = pl.pallas_call(
        kernel,
        out_shape=jax.ShapeDtypeStruct((B_pad, out_pads[-1]), latent.dtype),
        grid=grid,
        in_specs=in_specs,
        out_specs=out_spec,
        compiler_params=pltpu.CompilerParams(
            dimension_semantics=("parallel",),
            vmem_limit_bytes=vmem_limit,
        ),
    )(x, *params)

    if return_padded:
        return out_padded
    return out_padded[:B, :action_dim]


# --------------------------------------------------------------------------- #
# Init + reference
# --------------------------------------------------------------------------- #
def init_params(key, latent_dim, action_dim, net_dims):
    """PyTorch-style Linear init: U(-1/sqrt(fan_in), 1/sqrt(fan_in))."""
    dims = [latent_dim, *net_dims, action_dim]
    weights, biases = [], []
    for i in range(len(dims) - 1):
        fan_in, fan_out = dims[i], dims[i + 1]
        key, kw, kb = jax.random.split(key, 3)
        bound = 1.0 / (fan_in ** 0.5)
        weights.append(jax.random.uniform(kw, (fan_in, fan_out), jnp.float32,
                                          -bound, bound))
        biases.append(jax.random.uniform(kb, (fan_out,), jnp.float32,
                                         -bound, bound))
    return weights, biases


def reference_forward(latent, weights, biases, compute_dtype=jnp.float32):
    h = latent
    for i, (w, b) in enumerate(zip(weights, biases)):
        h = jnp.dot(h.astype(compute_dtype), w.astype(compute_dtype),
                    preferred_element_type=jnp.float32) \
            + jnp.asarray(b, jnp.float32).reshape(1, -1)
        if i < len(weights) - 1:
            h = jnp.maximum(h, 0.0)
    return h


# --------------------------------------------------------------------------- #
# Demo / self-check
# --------------------------------------------------------------------------- #
if __name__ == "__main__":
    # Shapes consistent with DiscreteActionNet(latent_dim=32, action_dim=8,
    # net_dims=(64, 64)); batch = 16.
    latent_dim, action_dim, net_dims, batch = 32, 8, (64, 64), 16

    key = jax.random.PRNGKey(0)
    key, k_x = jax.random.split(key)
    latent = jax.random.normal(k_x, (batch, latent_dim), jnp.float32)

    weights, biases = init_params(key, latent_dim, action_dim, net_dims)

    # One-time parameter preparation (hoisted out of the per-call hot path).
    prepared = prepare_params(weights, biases)

    # Hot path: the jitted function contains exactly one pallas_call plus a
    # fused pad/cast of the latent and the output slice.
    fwd = jax.jit(lambda x: discrete_action_net_forward(x, prepared))

    out = jax.block_until_ready(fwd(latent))

    # Same-precision (bf16 matmul, f32 accumulate / bias / ReLU) reference.
    ref_bf16 = reference_forward(latent, weights, biases, jnp.bfloat16)
    # Full f32 reference: loose tolerance bounding the bf16 cast error.
    ref_f32 = reference_forward(latent, weights, biases, jnp.float32)

    assert out.shape == (batch, action_dim)
    assert jnp.allclose(out, ref_bf16, atol=2e-3, rtol=2e-3), "mismatch vs bf16 reference"
    assert jnp.allclose(out, ref_f32, atol=5e-2, rtol=5e-2), "mismatch vs f32 reference"

    print("KERNEL_OK")
</pallas_src>

<mosaic_0001>
module attributes {stable_mosaic.version = 11 : i64} {
  func.func @kernel(%arg0: i32, %arg1: memref<16x32xbf16, #tpu.memory_space<vmem>>, %arg2: memref<32x128xbf16, #tpu.memory_space<vmem>>, %arg3: memref<1x128xf32, #tpu.memory_space<vmem>>, %arg4: memref<128x128xbf16, #tpu.memory_space<vmem>>, %arg5: memref<1x128xf32, #tpu.memory_space<vmem>>, %arg6: memref<128x128xbf16, #tpu.memory_space<vmem>>, %arg7: memref<1x128xf32, #tpu.memory_space<vmem>>, %arg8: memref<16x128xf32, #tpu.memory_space<vmem>>) attributes {dimension_semantics = [#tpu.dimension_semantics<parallel>], iteration_bounds = array<i64: 1>, scalar_prefetch = 0 : i64, scratch_operands = 0 : i64, tpu.core_type = #tpu.core_type<tc>, window_params = [{transform_indices = @transform_0, window_bounds = array<i64: 16, 32>}, {pipeline_mode = #tpu.pipeline_mode<synchronous>, transform_indices = @transform_1, window_bounds = array<i64: 32, 128>}, {pipeline_mode = #tpu.pipeline_mode<synchronous>, transform_indices = @transform_2, window_bounds = array<i64: 1, 128>}, {pipeline_mode = #tpu.pipeline_mode<synchronous>, transform_indices = @transform_3, window_bounds = array<i64: 128, 128>}, {pipeline_mode = #tpu.pipeline_mode<synchronous>, transform_indices = @transform_4, window_bounds = array<i64: 1, 128>}, {pipeline_mode = #tpu.pipeline_mode<synchronous>, transform_indices = @transform_5, window_bounds = array<i64: 128, 128>}, {pipeline_mode = #tpu.pipeline_mode<synchronous>, transform_indices = @transform_6, window_bounds = array<i64: 1, 128>}, {transform_indices = @transform_7, window_bounds = array<i64: 16, 128>}]} {
    %c0 = arith.constant 0 : index
    %c0_0 = arith.constant 0 : index
    %0 = vector.load %arg1[%c0, %c0_0] : memref<16x32xbf16, #tpu.memory_space<vmem>>, vector<16x32xbf16>
    %c0_1 = arith.constant 0 : index
    %c0_2 = arith.constant 0 : index
    %1 = vector.load %arg2[%c0_1, %c0_2] : memref<32x128xbf16, #tpu.memory_space<vmem>>, vector<32x128xbf16>
    %c0_3 = arith.constant 0 : index
    %c0_4 = arith.constant 0 : index
    %2 = vector.load %arg3[%c0_3, %c0_4] : memref<1x128xf32, #tpu.memory_space<vmem>>, vector<1x128xf32>
    %cst = arith.constant dense<0.000000e+00> : vector<16x128xf32>
    %3 = tpu.matmul %0, %1, %cst {dimension_numbers = #tpu.dot_dimension_numbers<[1], [0], [0], [1], [0, 0, 1, 1], [], []>} : vector<16x32xbf16>, vector<32x128xbf16>, vector<16x128xf32> -> vector<16x128xf32>
    %4 = vector.broadcast %2 : vector<1x128xf32> to vector<16x128xf32>
    %5 = arith.addf %3, %4 : vector<16x128xf32>
    %cst_5 = arith.constant 0.000000e+00 : f32
    %6 = vector.broadcast %cst_5 : f32 to vector<16x128xf32>
    %7 = arith.maximumf %5, %6 : vector<16x128xf32>
    %8 = arith.truncf %7 : vector<16x128xf32> to vector<16x128xbf16>
    %c0_6 = arith.constant 0 : index
    %c0_7 = arith.constant 0 : index
    %9 = vector.load %arg4[%c0_6, %c0_7] : memref<128x128xbf16, #tpu.memory_space<vmem>>, vector<128x128xbf16>
    %c0_8 = arith.constant 0 : index
    %c0_9 = arith.constant 0 : index
    %10 = vector.load %arg5[%c0_8, %c0_9] : memref<1x128xf32, #tpu.memory_space<vmem>>, vector<1x128xf32>
    %cst_10 = arith.constant dense<0.000000e+00> : vector<16x128xf32>
    %11 = tpu.matmul %8, %9, %cst_10 {dimension_numbers = #tpu.dot_dimension_numbers<[1], [0], [0], [1], [0, 0, 1, 1], [], []>} : vector<16x128xbf16>, vector<128x128xbf16>, vector<16x128xf32> -> vector<16x128xf32>
    %12 = vector.broadcast %10 : vector<1x128xf32> to vector<16x128xf32>
    %13 = arith.addf %11, %12 : vector<16x128xf32>
    %cst_11 = arith.constant 0.000000e+00 : f32
    %14 = vector.broadcast %cst_11 : f32 to vector<16x128xf32>
    %15 = arith.maximumf %13, %14 : vector<16x128xf32>
    %16 = arith.truncf %15 : vector<16x128xf32> to vector<16x128xbf16>
    %c0_12 = arith.constant 0 : index
    %c0_13 = arith.constant 0 : index
    %17 = vector.load %arg6[%c0_12, %c0_13] : memref<128x128xbf16, #tpu.memory_space<vmem>>, vector<128x128xbf16>
    %c0_14 = arith.constant 0 : index
    %c0_15 = arith.constant 0 : index
    %18 = vector.load %arg7[%c0_14, %c0_15] : memref<1x128xf32, #tpu.memory_space<vmem>>, vector<1x128xf32>
    %cst_16 = arith.constant dense<0.000000e+00> : vector<16x128xf32>
    %19 = tpu.matmul %16, %17, %cst_16 {dimension_numbers = #tpu.dot_dimension_numbers<[1], [0], [0], [1], [0, 0, 1, 1], [], []>} : vector<16x128xbf16>, vector<128x128xbf16>, vector<16x128xf32> -> vector<16x128xf32>
    %20 = vector.broadcast %18 : vector<1x128xf32> to vector<16x128xf32>
    %21 = arith.addf %19, %20 : vector<16x128xf32>
    %c0_17 = arith.constant 0 : index
    %c0_18 = arith.constant 0 : index
    %22 = vector.load %arg8[%c0_17, %c0_18] : memref<16x128xf32, #tpu.memory_space<vmem>>, vector<16x128xf32>
    tpu.vector_store %arg8[%c0_17, %c0_18], %21 {strides = array<i32>} : memref<16x128xf32, #tpu.memory_space<vmem>>, vector<16x128xf32>,
    return
  }
  func.func @transform_0(%arg0: i32) -> (i32, i32) {
    %c0_i32 = arith.constant 0 : i32
    %c0_i32_0 = arith.constant 0 : i32
    return %arg0, %c0_i32 : i32, i32
  }
  func.func @transform_1(%arg0: i32) -> (i32, i32) {
    %c0_i32 = arith.constant 0 : i32
    %c0_i32_0 = arith.constant 0 : i32
    %c0_i32_1 = arith.constant 0 : i32
    return %c0_i32, %c0_i32_0 : i32, i32
  }
  func.func @transform_2(%arg0: i32) -> (i32, i32) {
    %c0_i32 = arith.constant 0 : i32
    %c0_i32_0 = arith.constant 0 : i32
    %c0_i32_1 = arith.constant 0 : i32
    return %c0_i32, %c0_i32_0 : i32, i32
  }
  func.func @transform_3(%arg0: i32) -> (i32, i32) {
    %c0_i32 = arith.constant 0 : i32
    %c0_i32_0 = arith.constant 0 : i32
    %c0_i32_1 = arith.constant 0 : i32
    return %c0_i32, %c0_i32_0 : i32, i32
  }
  func.func @transform_4(%arg0: i32) -> (i32, i32) {
    %c0_i32 = arith.constant 0 : i32
    %c0_i32_0 = arith.constant 0 : i32
    %c0_i32_1 = arith.constant 0 : i32
    return %c0_i32, %c0_i32_0 : i32, i32
  }
  func.func @transform_5(%arg0: i32) -> (i32, i32) {
    %c0_i32 = arith.constant 0 : i32
    %c0_i32_0 = arith.constant 0 : i32
    %c0_i32_1 = arith.constant 0 : i32
    return %c0_i32, %c0_i32_0 : i32, i32
  }
  func.func @transform_6(%arg0: i32) -> (i32, i32) {
    %c0_i32 = arith.constant 0 : i32
    %c0_i32_0 = arith.constant 0 : i32
    %c0_i32_1 = arith.constant 0 : i32
    return %c0_i32, %c0_i32_0 : i32, i32
  }
  func.func @transform_7(%arg0: i32) -> (i32, i32) {
    %c0_i32 = arith.constant 0 : i32
    %c0_i32_0 = arith.constant 0 : i32
    return %arg0, %c0_i32 : i32, i32
  }
}

</mosaic_0001>

<llo_original>
// kernel: _lambda_.1
$region0: #{_lambda_.1}
  #allocation0 [shape = 'u32[]', space=smem, size = 0x4, offset = 0x4, fixed_abs, tag = 'smem constant byte address 0x4 - core index']
  #allocation1 [shape = 'u32[72,128]{1,0:T(1,128)}', space=vmem, size = 0x9000, scoped, tag = 'internal scratch']
  %s0 = inlined_call_operand.vmem [shape: bf16[16,32], index: 0, kind: input, shape index: {}]
  %s1 = inlined_call_operand.vmem [shape: bf16[32,128], index: 1, kind: input, shape index: {}]
  %s2 = inlined_call_operand.vmem [shape: f32[1,128], index: 2, kind: input, shape index: {}]
  %s3 = inlined_call_operand.hbm [shape: bf16[128,128], index: 3, kind: input, shape index: {}]
  %s4 = inlined_call_operand.vmem [shape: f32[1,128], index: 4, kind: input, shape index: {}]
  %s5 = inlined_call_operand.hbm [shape: bf16[128,128], index: 5, kind: input, shape index: {}]
  %s6 = inlined_call_operand.vmem [shape: f32[1,128], index: 6, kind: input, shape index: {}]
  %s7 = inlined_call_operand.vmem [shape: f32[16,128], index: 7, kind: output, shape index: {}]
  %s8 = sld [smem:[#allocation0]]
  $region46: #{_lambda_.1} parent=0
    _
  %s10 = ssub.s32 1, %s8
  %s11 = scalar_select 0, %s10, %s8
  $region1: #{_lambda_.1} parent=0
    #allocation2 [shape = 'u8[32768]{0}', space=vmem, size = 0x8000, scoped, tag = 'input window, operand 3, single buffered']
    #allocation3 [shape = 's32[1]{0}', space=sflag, size = 0x4, scoped, tag = 'scoped memory for _lambda_.1']
    #allocation4 [shape = 'u8[32768]{0}', space=vmem, size = 0x8000, scoped, tag = 'input window, operand 5, single buffered']
    #allocation5 [shape = 's32[1]{0}', space=sflag, size = 0x4, scoped, tag = 'scoped memory for _lambda_.1']
    %12 = vsyncpa [#allocation3], 0
    %13 = vsyncpa [#allocation5], 0
    // Predicated region
    $region2: #{_lambda_.1} parent=1 // pred_check
      _
    $region3: #{_lambda_.1} parent=1 // pred_check_branch
      %15 = sbr.rel (0) target = $region5
    $region4: #{_lambda_.1} parent=1 // pred_region
      _
    $region5: #{_lambda_.1} parent=1 // pred_fallthru
      _
    // Predicated region
    $region6: #{_lambda_.1} parent=1 // pred_check
      _
    $region7: #{_lambda_.1} parent=1 // pred_check_branch
      %17 = sbr.rel (0) target = $region9
    $region8: #{_lambda_.1} parent=1 // pred_region
      _
    $region9: #{_lambda_.1} parent=1 // pred_fallthru
      _
    // Predicated region
    $region10: #{_lambda_.1} parent=1 // pred_check
      _
    $region11: #{_lambda_.1} parent=1 // pred_check_branch
      %19 = sbr.rel (0) target = $region13
    $region12: #{_lambda_.1} parent=1 // pred_region
      _
    $region13: #{_lambda_.1} parent=1 // pred_fallthru
      _
    // Predicated region
    $region14: #{_lambda_.1} parent=1 // pred_check
      _
    $region15: #{_lambda_.1} parent=1 // pred_check_branch
      %21 = sbr.rel (0) target = $region17
    $region16: #{_lambda_.1} parent=1 // pred_region
      %23 = vsyncadd [#allocation3], 0
      %s24 = sshll.u32 %s3, 4
      %s25 = int_to_ptr.hbm [resolvable:$true] %s24
      %s26 = sshll.u32 [#allocation2], 4
      %s27 = int_to_ptr.vmem [resolvable:$true] %s26
      %32 = dma.hbm_to_vmem [thread:$0]  %s25, 1024, %s27, [#allocation3], 64, 64, 4
    $region17: #{_lambda_.1} parent=1 // pred_fallthru
      _
    // Predicated region
    $region18: #{_lambda_.1} parent=1 // pred_check
      _
    $region19: #{_lambda_.1} parent=1 // pred_check_branch
      %34 = sbr.rel (0) target = $region21
    $region20: #{_lambda_.1} parent=1 // pred_region
      _
    $region21: #{_lambda_.1} parent=1 // pred_fallthru
      _
    // Predicated region
    $region22: #{_lambda_.1} parent=1 // pred_check
      _
    $region23: #{_lambda_.1} parent=1 // pred_check_branch
      %36 = sbr.rel (0) target = $region25
    $region24: #{_lambda_.1} parent=1 // pred_region
      %38 = vsyncadd [#allocation5], 0
      %s39 = sshll.u32 %s5, 4
      %s40 = int_to_ptr.hbm [resolvable:$true] %s39
      %s41 = sshll.u32 [#allocation4], 4
      %s42 = int_to_ptr.vmem [resolvable:$true] %s41
      %47 = dma.hbm_to_vmem [thread:$0]  %s40, 1024, %s42, [#allocation5], 64, 64, 4
    $region25: #{_lambda_.1} parent=1 // pred_fallthru
      _
    // Predicated region
    $region26: #{_lambda_.1} parent=1 // pred_check
      _
    $region27: #{_lambda_.1} parent=1 // pred_check_branch
      %49 = sbr.rel (0) target = $region29
    $region28: #{_lambda_.1} parent=1 // pred_region
      _
    $region29: #{_lambda_.1} parent=1 // pred_fallthru
      _
    // Predicated region
    $region30: #{_lambda_.1} parent=1 // pred_check
      _
    $region31: #{_lambda_.1} parent=1 // pred_check_branch
      %51 = sbr.rel (0) target = $region33
    $region32: #{_lambda_.1} parent=1 // pred_region
      %53 = dma.done [#allocation3], 1024
    $region33: #{_lambda_.1} parent=1 // pred_fallthru
      _
    // Predicated region
    $region34: #{_lambda_.1} parent=1 // pred_check
      _
    $region35: #{_lambda_.1} parent=1 // pred_check_branch
      %55 = sbr.rel (0) target = $region37
    $region36: #{_lambda_.1} parent=1 // pred_region
      %57 = dma.done [#allocation5], 1024
    $region37: #{_lambda_.1} parent=1 // pred_fallthru
      _
    %v59 = vld [vmem:[%s0] sm:$0xf]
    %v60 = vld [vmem:[%s0 + $0x4] sm:$0xf]
    %v61 = vld [vmem:[%s1] sm:$0xf]
    %v62 = vld [vmem:[%s1 + $0x4] sm:$0xf]
    %v63 = vld [vmem:[%s1 + $0x8] sm:$0xf]
    %v64 = vld [vmem:[%s1 + $0xc] sm:$0xf]
    %v65 = vld [vmem:[%s2] sm:$0x1]
    %v67 = vperm.slane %v65, 0
    %v71 = vunpack.c.l.b16 %v59
    %v72 = vunpack.c.l.b16 %v60
    %v73 = vpack.c.b16 %v72, %v71
    %v78 = vunpack.c.l.b16 %v61
    %v79 = vunpack.c.l.b16 %v62
    %v80 = vunpack.c.l.b16 %v63
    %v81 = vunpack.c.l.b16 %v64
    %v82 = vpack.c.b16 %v79, %v78
    %v83 = vpack.c.b16 %v81, %v80
    %vm86 = vcmask 261120
    %v88 = vsel %vm86, %v73, 0
    %90 = vmatpush.bf16.msra.mxu0 0
    %91 = vmatpush.bf16.msra.mxu0 0
    %92 = vmatpush.bf16.msra.mxu0 0
    %93 = vmatpush.bf16.msra.mxu0 0
    %94 = vmatpush.bf16.msra.mxu0 0
    %95 = vmatpush.bf16.msra.mxu0 0
    %96 = vmatpush.bf16.msra.mxu0 %v83
    %97 = vmatpush.bf16.msra.mxu0 %v82
    %98 = vmatmul.bf16.gmra.mxu0 %v88
    %v99 = vpop.f32.mrf.mxu0
    %v100 = vadd.f32 %v67, %v99
    %v101 = vpop.f32.mrf.mxu0
    %v102 = vadd.f32 %v67, %v101
    %103 = vdwg.mxu0
    %v104 = vmax.f32 %v100, 0.0
    %v105 = vmax.f32 %v102, 0.0
    %v106 = vpack.c.bf16 %v105, %v104
    %v107 = vld [vmem:[#allocation2] sm:$0xf]
    %v108 = vld [vmem:[#allocation2 + $0x4] sm:$0xf]
    %v109 = vld [vmem:[#allocation2 + $0x8] sm:$0xf]
    %v110 = vld [vmem:[#allocation2 + $0xc] sm:$0xf]
    %v111 = vld [vmem:[#allocation2 + $0x10] sm:$0xf]
    %v112 = vld [vmem:[#allocation2 + $0x14] sm:$0xf]
    %v113 = vld [vmem:[#allocation2 + $0x18] sm:$0xf]
    %v114 = vld [vmem:[#allocation2 + $0x1c] sm:$0xf]
    %v115 = vld [vmem:[#allocation2 + $0x20] sm:$0xf]
    %v116 = vld [vmem:[#allocation2 + $0x24] sm:$0xf]
    %v117 = vld [vmem:[#allocation2 + $0x28] sm:$0xf]
    %v118 = vld [vmem:[#allocation2 + $0x2c] sm:$0xf]
    %v119 = vld [vmem:[#allocation2 + $0x30] sm:$0xf]
    %v120 = vld [vmem:[#allocation2 + $0x34] sm:$0xf]
    %v121 = vld [vmem:[#allocation2 + $0x38] sm:$0xf]
    %v122 = vld [vmem:[#allocation2 + $0x3c] sm:$0xf]
    %v123 = vld [vmem:[%s4] sm:$0x1]
    %v125 = vperm.slane %v123, 0
    %v143 = vunpack.c.l.b16 %v107
    %v144 = vunpack.c.l.b16 %v108
    %v145 = vunpack.c.l.b16 %v109
    %v146 = vunpack.c.l.b16 %v110
    %v147 = vunpack.c.l.b16 %v111
    %v148 = vunpack.c.l.b16 %v112
    %v149 = vunpack.c.l.b16 %v113
    %v150 = vunpack.c.l.b16 %v114
    %v151 = vunpack.c.l.b16 %v115
    %v152 = vunpack.c.l.b16 %v116
    %v153 = vunpack.c.l.b16 %v117
    %v154 = vunpack.c.l.b16 %v118
    %v155 = vunpack.c.l.b16 %v119
    %v156 = vunpack.c.l.b16 %v120
    %v157 = vunpack.c.l.b16 %v121
    %v158 = vunpack.c.l.b16 %v122
    %v159 = vpack.c.b16 %v144, %v143
    %v160 = vpack.c.b16 %v146, %v145
    %v161 = vpack.c.b16 %v148, %v147
    %v162 = vpack.c.b16 %v150, %v149
    %v163 = vpack.c.b16 %v152, %v151
    %v164 = vpack.c.b16 %v154, %v153
    %v165 = vpack.c.b16 %v156, %v155
    %v166 = vpack.c.b16 %v158, %v157
    %175 = vmatpush.bf16.msra.mxu0 %v166
    %176 = vmatpush.bf16.msra.mxu0 %v165
    %177 = vmatpush.bf16.msra.mxu0 %v164
    %178 = vmatpush.bf16.msra.mxu0 %v163
    %179 = vmatpush.bf16.msra.mxu0 %v162
    %180 = vmatpush.bf16.msra.mxu0 %v161
    %181 = vmatpush.bf16.msra.mxu0 %v160
    %182 = vmatpush.bf16.msra.mxu0 %v159
    %183 = vmatmul.bf16.gmra.mxu0 %v106
    %v184 = vpop.f32.mrf.mxu0
    %v185 = vadd.f32 %v125, %v184
    %v186 = vpop.f32.mrf.mxu0
    %v187 = vadd.f32 %v125, %v186
    %188 = vdwg.mxu0
    %v189 = vmax.f32 %v185, 0.0
    %v190 = vmax.f32 %v187, 0.0
    %v191 = vpack.c.bf16 %v190, %v189
    %v192 = vld [vmem:[#allocation4] sm:$0xf]
    %v193 = vld [vmem:[#allocation4 + $0x4] sm:$0xf]
    %v194 = vld [vmem:[#allocation4 + $0x8] sm:$0xf]
    %v195 = vld [vmem:[#allocation4 + $0xc] sm:$0xf]
    %v196 = vld [vmem:[#allocation4 + $0x10] sm:$0xf]
    %v197 = vld [vmem:[#allocation4 + $0x14] sm:$0xf]
    %v198 = vld [vmem:[#allocation4 + $0x18] sm:$0xf]
    %v199 = vld [vmem:[#allocation4 + $0x1c] sm:$0xf]
    %v200 = vld [vmem:[#allocation4 + $0x20] sm:$0xf]
    %v201 = vld [vmem:[#allocation4 + $0x24] sm:$0xf]
    %v202 = vld [vmem:[#allocation4 + $0x28] sm:$0xf]
    %v203 = vld [vmem:[#allocation4 + $0x2c] sm:$0xf]
    %v204 = vld [vmem:[#allocation4 + $0x30] sm:$0xf]
    %v205 = vld [vmem:[#allocation4 + $0x34] sm:$0xf]
    %v206 = vld [vmem:[#allocation4 + $0x38] sm:$0xf]
    %v207 = vld [vmem:[#allocation4 + $0x3c] sm:$0xf]
    %v208 = vld [vmem:[%s6] sm:$0x1]
    %v210 = vperm.slane %v208, 0
    %v228 = vunpack.c.l.b16 %v192
    %v229 = vunpack.c.l.b16 %v193
    %v230 = vunpack.c.l.b16 %v194
    %v231 = vunpack.c.l.b16 %v195
    %v232 = vunpack.c.l.b16 %v196
    %v233 = vunpack.c.l.b16 %v197
    %v234 = vunpack.c.l.b16 %v198
    %v235 = vunpack.c.l.b16 %v199
    %v236 = vunpack.c.l.b16 %v200
    %v237 = vunpack.c.l.b16 %v201
    %v238 = vunpack.c.l.b16 %v202
    %v239 = vunpack.c.l.b16 %v203
    %v240 = vunpack.c.l.b16 %v204
    %v241 = vunpack.c.l.b16 %v205
    %v242 = vunpack.c.l.b16 %v206
    %v243 = vunpack.c.l.b16 %v207
    %v244 = vpack.c.b16 %v229, %v228
    %v245 = vpack.c.b16 %v231, %v230
    %v246 = vpack.c.b16 %v233, %v232
    %v247 = vpack.c.b16 %v235, %v234
    %v248 = vpack.c.b16 %v237, %v236
    %v249 = vpack.c.b16 %v239, %v238
    %v250 = vpack.c.b16 %v241, %v240
    %v251 = vpack.c.b16 %v243, %v242
    %260 = vmatpush.bf16.msra.mxu0 %v251
    %261 = vmatpush.bf16.msra.mxu0 %v250
    %262 = vmatpush.bf16.msra.mxu0 %v249
    %263 = vmatpush.bf16.msra.mxu0 %v248
    %264 = vmatpush.bf16.msra.mxu0 %v247
    %265 = vmatpush.bf16.msra.mxu0 %v246
    %266 = vmatpush.bf16.msra.mxu0 %v245
    %267 = vmatpush.bf16.msra.mxu0 %v244
    %268 = vmatmul.bf16.gmra.mxu0 %v191
    %v269 = vpop.f32.mrf.mxu0
    %v270 = vadd.f32 %v210, %v269
    %v271 = vpop.f32.mrf.mxu0
    %v272 = vadd.f32 %v210, %v271
    %273 = vdwg.mxu0
    %274 = vst [vmem:[%s7] sm:$0xff] %v270
    %275 = vst [vmem:[%s7 + $0x8] sm:$0xff] %v272
    // Predicated region
    $region38: #{_lambda_.1} parent=1 // pred_check
      _
    $region39: #{_lambda_.1} parent=1 // pred_check_branch
      %277 = sbr.rel (0) target = $region41
    $region40: #{_lambda_.1} parent=1 // pred_region
      _
    $region41: #{_lambda_.1} parent=1 // pred_fallthru
      _
    // Predicated region
    $region42: #{_lambda_.1} parent=1 // pred_check
      _
    $region43: #{_lambda_.1} parent=1 // pred_check_branch
      %279 = sbr.rel (0) target = $region45
    $region44: #{_lambda_.1} parent=1 // pred_region
      _
    $region45: #{_lambda_.1} parent=1 // pred_fallthru
      _
    %280 = vsyncpa [#allocation3], 1
    %281 = vsyncpa [#allocation5], 1

</llo_original>
